<compile_context>
chip_gen: v6e
topology: v6e:2x2x1
jax: 0.10.0
libtpu: 0.0.40
codegen_flags: <defaults>
</compile_context>

<pallas_src>
import functools
import math

import jax
import jax.numpy as jnp
from jax.experimental import pallas as pl
from jax.experimental.pallas import tpu as pltpu

_OUT_BLOCK_BYTES = 2 * 1024 * 1024  # per-buffer output budget (raiseable on v6e)


def _cdiv(a, b):
    return -(-a // b)


def _round_up(a, m):
    return _cdiv(a, m) * m


def _sin_pos_emb_kernel(x_ref, out_ref, *, g, dim, half_dim, neg_scale):
    # x_ref:   (TB, g)      float32 timesteps, g logical rows per packed row.
    # out_ref: (TB, g*dim)  packed embeddings; lanes [grp*dim, (grp+1)*dim)
    #          of packed row r hold the embedding of timestep x_ref[r, grp].
    tb, gd = out_ref.shape
    lane = jax.lax.broadcasted_iota(jnp.int32, (1, gd), 1)

    # j = lane % dim and the per-lane timestep, built with compare/select only
    # (pure VPU work, no lane-axis relayouts).
    j = lane
    x_exp = jnp.broadcast_to(x_ref[:, 0:1], (tb, gd))
    for grp in range(1, g):
        in_or_after = lane >= grp * dim
        j = jnp.where(in_or_after, lane - grp * dim, j)
        x_exp = jnp.where(in_or_after, x_ref[:, grp:grp + 1], x_exp)

    is_cos = j >= half_dim
    k = jnp.where(is_cos, j - half_dim, j).astype(jnp.float32)
    freq = jnp.exp(k * neg_scale)                                   # (1, gd)
    phase = jnp.where(is_cos, jnp.float32(math.pi / 2.0), jnp.float32(0.0))

    # One transcendental per output element; cos(t) == sin(t + pi/2).
    row = jnp.sin(x_exp * freq + phase)
    out_ref[...] = row.astype(out_ref.dtype)


def sinusoidal_pos_emb(x: jax.Array, dim: int, *,
                       out_dtype=jnp.float32,
                       block_rows: int | None = None,
                       use_pallas: bool | None = None) -> jax.Array:
    """Pallas implementation of SinusoidalPosEmb.forward.

    x:   (B,) timesteps.
    out: (B, dim) = [sin(x*freq) | cos(x*freq)]   (same order as torch.cat).
    """
    assert x.ndim == 1
    assert dim % 2 == 0 and dim >= 4, "dim must be even and >= 4 (half_dim - 1 > 0)"
    b = int(x.shape[0])
    half_dim = dim // 2
    neg_scale = -(math.log(10000.0) / (half_dim - 1))

    # Tiny problems: launch overhead dwarfs the work; let XLA fuse plain jnp.
    if use_pallas is None:
        use_pallas = b * dim >= (1 << 14)
    if not use_pallas:
        freqs = jnp.exp(jnp.arange(half_dim, dtype=jnp.float32) * neg_scale)
        emb = x.astype(jnp.float32)[:, None] * freqs[None, :]
        return jnp.concatenate([jnp.sin(emb), jnp.cos(emb)], axis=-1).astype(out_dtype)

    # ---- lane-dense packed layout ----
    g = math.lcm(dim, 128) // dim          # logical rows per packed row
    gd = g * dim                           # packed row width (multiple of 128)
    pb = _cdiv(b, g)                       # number of packed rows
    bp = pb * g                            # logical rows incl. (< g) tail pad

    xf = x.astype(jnp.float32)
    if bp != b:
        xf = jnp.pad(xf, (0, bp - b))      # tiny 1-D pad, < g elements
    x_packed = xf.reshape(pb, g)

    out_itemsize = jnp.dtype(out_dtype).itemsize
    if block_rows is None:
        # Budget ~2 MiB per double-buffered block, counting the lane-padded x
        # block (g lanes pad to 128 => 512 B/row f32).  Amortizes the ~0.35 us
        # per-grid-step overhead while staying well inside v5e's 16 MiB /
        # v7x's 32 MiB scoped-VMEM defaults (incl. elementwise temporaries).
        per_row_bytes = gd * out_itemsize + 128 * 4
        budget_rows = max(8, (_OUT_BLOCK_BYTES // per_row_bytes) // 8 * 8)
        # Give v7x's two TensorCores at least two grid steps when possible.
        two_way = _round_up(_cdiv(pb, 2), 8)
        block_rows = max(8, min(budget_rows, two_way))
    else:
        block_rows = max(8, _round_up(block_rows, 8))
    n_blocks = _cdiv(pb, block_rows)       # ragged last block is masked by Pallas

    kernel = functools.partial(_sin_pos_emb_kernel, g=g, dim=dim,
                               half_dim=half_dim, neg_scale=neg_scale)

    out = pl.pallas_call(
        kernel,
        out_shape=jax.ShapeDtypeStruct((pb, gd), out_dtype),
        grid=(n_blocks,),
        in_specs=[pl.BlockSpec((block_rows, g), lambda i: (i, 0))],
        out_specs=pl.BlockSpec((block_rows, gd), lambda i: (i, 0)),
        compiler_params=pltpu.CompilerParams(
            dimension_semantics=("parallel",),
        ),
        cost_estimate=pl.CostEstimate(
            flops=2 * pb * gd,             # mul + add per output element
            transcendentals=pb * gd,       # one sin per output element
            bytes_accessed=pb * g * 4 + pb * gd * out_itemsize,
        ),
    )(x_packed)

    out = out.reshape(bp, dim)             # layout plumbing back to (B, dim)
    if bp != b:
        out = out[:b]
    return out


def _reference(x: jax.Array, dim: int) -> jax.Array:
    half_dim = dim // 2
    scale = math.log(10000.0) / (half_dim - 1)
    freqs = jnp.exp(jnp.arange(half_dim, dtype=jnp.float32) * -scale)
    emb = x.astype(jnp.float32)[:, None] * freqs[None, :]
    return jnp.concatenate([jnp.sin(emb), jnp.cos(emb)], axis=-1)


if __name__ == "__main__":
    k1, k2 = jax.random.split(jax.random.PRNGKey(0))

    # Case 1: small dim (lane-packing path, g = 4), two grid steps.
    batch, dim = 64, 32
    x = jax.random.uniform(k1, (batch,), dtype=jnp.float32, minval=0.0, maxval=64.0)
    out = jax.block_until_ready(sinusoidal_pos_emb(x, dim, use_pallas=True))
    ref = _reference(x, dim)
    assert out.shape == (batch, dim)
    assert jnp.allclose(out, ref, atol=1e-3, rtol=1e-3), "case 1 mismatch vs reference"

    # Case 2: ragged batch + non-power-of-two dim (g = 8, masked last block).
    batch2, dim2 = 50, 48
    x2 = jax.random.uniform(k2, (batch2,), dtype=jnp.float32, minval=0.0, maxval=64.0)
    out2 = jax.block_until_ready(sinusoidal_pos_emb(x2, dim2, use_pallas=True))
    ref2 = _reference(x2, dim2)
    assert out2.shape == (batch2, dim2)
    assert jnp.allclose(out2, ref2, atol=1e-3, rtol=1e-3), "case 2 mismatch vs reference"

    print("KERNEL_OK")
</pallas_src>

<mosaic_0001>
module attributes {stable_mosaic.version = 11 : i64} {
  func.func @_sin_pos_emb_kernel(%arg0: i32, %arg1: memref<8x4xf32, #tpu.memory_space<vmem>>, %arg2: memref<8x128xf32, #tpu.memory_space<vmem>>) attributes {dimension_semantics = [#tpu.dimension_semantics<parallel>], iteration_bounds = array<i64: 2>, scalar_prefetch = 0 : i64, scratch_operands = 0 : i64, tpu.core_type = #tpu.core_type<tc>, window_params = [{transform_indices = @transform_0, window_bounds = array<i64: 8, 4>}, {transform_indices = @transform_1, window_bounds = array<i64: 8, 128>}]} {
    %0 = tpu.iota {dimensions = array<i32: 1>} : vector<1x128xi32>
    %c0 = arith.constant 0 : index
    %c0_0 = arith.constant 0 : index
    %1 = vector.load %arg1[%c0, %c0_0] : memref<8x4xf32, #tpu.memory_space<vmem>>, vector<8x1xf32>
    %2 = vector.shape_cast %1 : vector<8x1xf32> to vector<8x1xf32>
    %3 = vector.broadcast %2 : vector<8x1xf32> to vector<8x128xf32>
    %c32_i32 = arith.constant 32 : i32
    %4 = vector.broadcast %c32_i32 : i32 to vector<1x128xi32>
    %5 = arith.cmpi sge, %0, %4 : vector<1x128xi32>
    %c32_i32_1 = arith.constant 32 : i32
    %6 = vector.broadcast %c32_i32_1 : i32 to vector<1x128xi32>
    %7 = arith.subi %0, %6 : vector<1x128xi32>
    %8 = arith.select %5, %7, %0 : vector<1x128xi1>, vector<1x128xi32>
    %c0_2 = arith.constant 0 : index
    %c1 = arith.constant 1 : index
    %9 = vector.load %arg1[%c0_2, %c1] : memref<8x4xf32, #tpu.memory_space<vmem>>, vector<8x1xf32>
    %10 = vector.shape_cast %5 : vector<1x128xi1> to vector<1x128xi1>
    %11 = vector.broadcast %10 : vector<1x128xi1> to vector<8x128xi1>
    %12 = vector.shape_cast %9 : vector<8x1xf32> to vector<8x1xf32>
    %13 = vector.broadcast %12 : vector<8x1xf32> to vector<8x128xf32>
    %14 = arith.select %11, %13, %3 : vector<8x128xi1>, vector<8x128xf32>
    %c64_i32 = arith.constant 64 : i32
    %15 = vector.broadcast %c64_i32 : i32 to vector<1x128xi32>
    %16 = arith.cmpi sge, %0, %15 : vector<1x128xi32>
    %c64_i32_3 = arith.constant 64 : i32
    %17 = vector.broadcast %c64_i32_3 : i32 to vector<1x128xi32>
    %18 = arith.subi %0, %17 : vector<1x128xi32>
    %19 = arith.select %16, %18, %8 : vector<1x128xi1>, vector<1x128xi32>
    %c0_4 = arith.constant 0 : index
    %c2 = arith.constant 2 : index
    %20 = vector.load %arg1[%c0_4, %c2] : memref<8x4xf32, #tpu.memory_space<vmem>>, vector<8x1xf32>
    %21 = vector.shape_cast %16 : vector<1x128xi1> to vector<1x128xi1>
    %22 = vector.broadcast %21 : vector<1x128xi1> to vector<8x128xi1>
    %23 = vector.shape_cast %20 : vector<8x1xf32> to vector<8x1xf32>
    %24 = vector.broadcast %23 : vector<8x1xf32> to vector<8x128xf32>
    %25 = arith.select %22, %24, %14 : vector<8x128xi1>, vector<8x128xf32>
    %c96_i32 = arith.constant 96 : i32
    %26 = vector.broadcast %c96_i32 : i32 to vector<1x128xi32>
    %27 = arith.cmpi sge, %0, %26 : vector<1x128xi32>
    %c96_i32_5 = arith.constant 96 : i32
    %28 = vector.broadcast %c96_i32_5 : i32 to vector<1x128xi32>
    %29 = arith.subi %0, %28 : vector<1x128xi32>
    %30 = arith.select %27, %29, %19 : vector<1x128xi1>, vector<1x128xi32>
    %c0_6 = arith.constant 0 : index
    %c3 = arith.constant 3 : index
    %31 = vector.load %arg1[%c0_6, %c3] : memref<8x4xf32, #tpu.memory_space<vmem>>, vector<8x1xf32>
    %32 = vector.shape_cast %27 : vector<1x128xi1> to vector<1x128xi1>
    %33 = vector.broadcast %32 : vector<1x128xi1> to vector<8x128xi1>
    %34 = vector.shape_cast %31 : vector<8x1xf32> to vector<8x1xf32>
    %35 = vector.broadcast %34 : vector<8x1xf32> to vector<8x128xf32>
    %36 = arith.select %33, %35, %25 : vector<8x128xi1>, vector<8x128xf32>
    %c16_i32 = arith.constant 16 : i32
    %37 = vector.broadcast %c16_i32 : i32 to vector<1x128xi32>
    %38 = arith.cmpi sge, %30, %37 : vector<1x128xi32>
    %c16_i32_7 = arith.constant 16 : i32
    %39 = vector.broadcast %c16_i32_7 : i32 to vector<1x128xi32>
    %40 = arith.subi %30, %39 : vector<1x128xi32>
    %41 = arith.select %38, %40, %30 : vector<1x128xi1>, vector<1x128xi32>
    %42 = arith.sitofp %41 : vector<1x128xi32> to vector<1x128xf32>
    %cst = arith.constant -0.614022672 : f32
    %43 = vector.broadcast %cst : f32 to vector<1x128xf32>
    %44 = arith.mulf %42, %43 : vector<1x128xf32>
    %45 = math.exp %44 : vector<1x128xf32>
    %cst_8 = arith.constant 1.57079637 : f32
    %cst_9 = arith.constant 0.000000e+00 : f32
    %46 = vector.broadcast %cst_8 : f32 to vector<1x128xf32>
    %47 = vector.broadcast %cst_9 : f32 to vector<1x128xf32>
    %48 = arith.select %38, %46, %47 : vector<1x128xi1>, vector<1x128xf32>
    %49 = vector.broadcast %45 : vector<1x128xf32> to vector<8x128xf32>
    %50 = arith.mulf %36, %49 : vector<8x128xf32>
    %51 = vector.broadcast %48 : vector<1x128xf32> to vector<8x128xf32>
    %52 = arith.addf %50, %51 : vector<8x128xf32>
    %53 = math.sin %52 : vector<8x128xf32>
    %c0_10 = arith.constant 0 : index
    %c0_11 = arith.constant 0 : index
    %54 = vector.load %arg2[%c0_10, %c0_11] : memref<8x128xf32, #tpu.memory_space<vmem>>, vector<8x128xf32>
    tpu.vector_store %arg2[%c0_10, %c0_11], %53 {strides = array<i32>} : memref<8x128xf32, #tpu.memory_space<vmem>>, vector<8x128xf32>,
    return
  }
  func.func @transform_0(%arg0: i32) -> (i32, i32) {
    %c0_i32 = arith.constant 0 : i32
    %c0_i32_0 = arith.constant 0 : i32
    return %arg0, %c0_i32 : i32, i32
  }
  func.func @transform_1(%arg0: i32) -> (i32, i32) {
    %c0_i32 = arith.constant 0 : i32
    %c0_i32_0 = arith.constant 0 : i32
    return %arg0, %c0_i32 : i32, i32
  }
}

</mosaic_0001>

<llo_original>
// kernel: tpu_custom_call.1
$region0: #{tpu_custom_call.1}
  #allocation0 [shape = 'u32[]', space=smem, size = 0x4, offset = 0x4, fixed_abs, tag = 'smem constant byte address 0x4 - core index']
  #allocation1 [shape = 'u32[144,128]{1,0:T(1,128)}', space=vmem, size = 0x12000, scoped, tag = 'internal scratch']
  %s0 = inlined_call_operand.vmem [shape: f32[16,4], index: 0, kind: input, shape index: {}]
  %s1 = inlined_call_operand.hbm [shape: f32[16,128], index: 1, kind: output, shape index: {}]
  %s2 = sld [smem:[#allocation0]]
  $region37: #{tpu_custom_call.1} parent=0
    _
  %s4 = ssub.s32 1, %s2
  %s5 = scalar_select 0, %s4, %s2
  $region1: #{tpu_custom_call.1} parent=0
    #allocation2 [shape = 'u8[8192]{0}', space=vmem, size = 0x2000, scoped, tag = 'output window, operand 0']
    #allocation3 [shape = 's32[2]{0}', space=sflag, size = 0x8, scoped, tag = 'scoped memory for tpu_custom_call.1']
    %6 = vsyncpa [#allocation3], 0
    %s7 = scalar_lea.sflag [#allocation3], 1
    %8 = vsyncpa %s7, 0
    loop: start=0, step=1, limit=4
    $region2: #{tpu_custom_call.1} parent=1 // loop_pre_header
      _
    $region3: #{tpu_custom_call.1} parent=1 // loop_header
      %s10 = sphi 0, %s14
      %p11 = scmp.ge.s32.totalorder %s10, 4
      %s20 = sphi 0, %s22
      %s23 = sphi 0, %s20
      %s24 = sphi 0, %s23
      %s40 = sphi 0, %s24
      %s46 = sphi 0, %s48
      %s49 = sphi 0, %s46
      %s50 = sphi 0, %s49
      %s66 = sphi 0, %s50
    $region4: #{tpu_custom_call.1} parent=1 // loop_header_branch
      %13 = sbr.rel (%p11) target = $region8
    $region5: #{tpu_custom_call.1} parent=1 // loop_body
      %s15 = ssub.s32 %s10, 1
      %s16 = ssub.s32 %s10, 2
      %s17 = sadd.s32 %s10, 1
      %s18 = ssub.s32 %s10, %s17
      %p19 = scmp.eq.s32.totalorder %s18, 0
      %s21 = sadd.s32 %s20, 1
      %s22 = scalar_select %p19, %s20, %s21
      %p25 = pneg %p19
      %p26 = scmp.eq.s32.totalorder %s10, 1
      %p27 = por %p25, %p26
      %p28 = scmp.ne.s32.totalorder %s20, %s23
      %p29 = scmp.eq.s32.totalorder %s10, 0
      %p30 = por %p28, %p29
      %p31 = scmp.ne.s32.totalorder %s20, %s23
      %p32 = scmp.eq.s32.totalorder %s15, 1
      %p33 = por %p31, %p32
      %p34 = scmp.ne.s32.totalorder %s23, %s24
      %p35 = scmp.eq.s32.totalorder %s15, 0
      %p36 = por %p34, %p35
      %p37 = scmp.ne.s32.totalorder %s23, %s24
      %p38 = scmp.eq.s32.totalorder %s16, 1
      %p39 = por %p37, %p38
      %p41 = scmp.ne.s32.totalorder %s24, %s40
      %p42 = scmp.eq.s32.totalorder %s16, 0
      %p43 = por %p41, %p42
      %s44 = ssub.s32 %s10, %s17
      %p45 = scmp.eq.s32.totalorder %s44, 0
      %s47 = sadd.s32 %s46, 1
      %s48 = scalar_select %p45, %s46, %s47
      %p51 = pneg %p45
      %p52 = scmp.eq.s32.totalorder %s10, 1
      %p53 = por %p51, %p52
      %p54 = scmp.ne.s32.totalorder %s46, %s49
      %p55 = scmp.eq.s32.totalorder %s10, 0
      %p56 = por %p54, %p55
      %p57 = scmp.ne.s32.totalorder %s46, %s49
      %p58 = scmp.eq.s32.totalorder %s15, 1
      %p59 = por %p57, %p58
      %p60 = scmp.ne.s32.totalorder %s49, %s50
      %p61 = scmp.eq.s32.totalorder %s15, 0
      %p62 = por %p60, %p61
      %p63 = scmp.ne.s32.totalorder %s49, %s50
      %p64 = scmp.eq.s32.totalorder %s16, 1
      %p65 = por %p63, %p64
      %p67 = scmp.ne.s32.totalorder %s50, %s66
      %p68 = scmp.eq.s32.totalorder %s16, 0
      %p69 = por %p67, %p68
      %p70 = scmp.le.s32.totalorder 1, %s10
      %p71 = scmp.lt.s32.totalorder %s10, 3
      %p72 = pnand %p70, %p71
      %p73 = pneg %p72
      // Predicated region
      $region9: #{tpu_custom_call.1} parent=5 // pred_check
        _
      $region10: #{tpu_custom_call.1} parent=5 // pred_check_branch
        %75 = sbr.rel (%p72) target = $region12
      $region11: #{tpu_custom_call.1} parent=5 // pred_region
        %s76 = ssub.s32 %s10, 1
      $region12: #{tpu_custom_call.1} parent=5 // pred_fallthru
        _
      %p77 = scmp.lt.s32.totalorder %s10, 2
      // Predicated region
      $region13: #{tpu_custom_call.1} parent=5 // pred_check
        %p78 = pneg %p77
      $region14: #{tpu_custom_call.1} parent=5 // pred_check_branch
        %80 = sbr.rel (%p78) target = $region16
      $region15: #{tpu_custom_call.1} parent=5 // pred_region
        // Predicated region
        $region17: #{tpu_custom_call.1} parent=15 // pred_check
          %p81 = pneg %p30
        $region18: #{tpu_custom_call.1} parent=15 // pred_check_branch
          %83 = sbr.rel (%p81) target = $region20
        $region19: #{tpu_custom_call.1} parent=15 // pred_region
          %p84 = scmp.lt.s32.totalorder %s10, 1
          %s85 = scalar_select %p84, %s10, 1
          %s86 = smul.addr %s85, 8
          %s87 = scalar_lea.vmem %s0, %s86
        $region20: #{tpu_custom_call.1} parent=15 // pred_fallthru
          _
      $region16: #{tpu_custom_call.1} parent=5 // pred_fallthru
        _
      %p88 = scmp.le.s32.totalorder 1, %s10
      %p89 = scmp.lt.s32.totalorder %s10, 3
      %p90 = pnand %p88, %p89
      %p91 = pneg %p90
      // Predicated region
      $region21: #{tpu_custom_call.1} parent=5 // pred_check
        _
      $region22: #{tpu_custom_call.1} parent=5 // pred_check_branch
        %93 = sbr.rel (%p90) target = $region24
      $region23: #{tpu_custom_call.1} parent=5 // pred_region
        %s94 = ssub.s32 %s10, 1
        %p95 = scmp.lt.s32.totalorder %s15, 1
        %s96 = scalar_select %p95, %s15, 1
        %s97 = smul.addr %s96, 8
        %s98 = scalar_lea.vmem %s0, %s97
        %p99 = pneg %p36
        %p100 = pneg %p33
        %p101 = pneg %p62
        %p102 = pneg %p59
        %s103 = sand.u32 %s49, 1
        %s104 = scalar_lea.sflag [#allocation3], %s103
        %s105 = sand.u32 %s49, 1
        %s106 = smul.addr %s105, 8
        %s107 = scalar_lea.vmem [#allocation2], %s106
        %p108 = scmp.lt.s32.totalorder %s15, 1
        %s109 = scalar_select %p108, %s15, 1
        %s110 = smul.addr %s109, 8
        %s111 = scalar_lea.vmem %s0, %s110
        %v112 = vlaneseq
        %v113 = vand.u32 %v112, 127
        %v114 = vld [vmem:[%s111] sm:$0xff]
        %116 = vset.pattern.permute.xlu0 0
        %117 = vperm.xlu0 %116, %v114
        %v118 = vpop.permute.xlu0 %117
        %vm120 = vcmp.ge.s32.totalorder %v113, 32
        %v121 = vsub.s32 %v113, 32
        %v122 = vsel %vm120, %v121, %v113
        %v123 = vsel %vm120, 1, 0
        %vm124 = vcmp.eq.s32.totalorder %v123, 1
        %125 = vset.pattern.permute.xlu0 1
        %126 = vperm.xlu0 %125, %v114
        %v127 = vpop.permute.xlu0 %126
        %v129 = vsel %vm124, %v127, %v118
        %vm130 = vcmp.ge.s32.totalorder %v113, 64
        %v131 = vsub.s32 %v113, 64
        %v132 = vsel %vm130, %v131, %v122
        %v133 = vsel %vm130, 1, 0
        %vm134 = vcmp.eq.s32.totalorder %v133, 1
        %135 = vset.pattern.permute.xlu0 2
        %136 = vperm.xlu0 %135, %v114
        %v137 = vpop.permute.xlu0 %136
        %v139 = vsel %vm134, %v137, %v129
        %vm140 = vcmp.ge.s32.totalorder %v113, 96
        %v141 = vsub.s32 %v113, 96
        %v142 = vsel %vm140, %v141, %v132
        %v143 = vsel %vm140, 1, 0
        %vm144 = vcmp.eq.s32.totalorder %v143, 1
        %145 = vset.pattern.permute.xlu0 3
        %146 = vperm.xlu0 %145, %v114
        %v147 = vpop.permute.xlu0 %146
        %v149 = vsel %vm144, %v147, %v139
        %vm150 = vcmp.ge.s32.totalorder %v142, 16
        %v151 = vsub.s32 %v142, 16
        %v152 = vsel %vm150, %v151, %v142
        %v153 = vcvt.s32.f32 %v152
        %v154 = vmul.f32 %v153, -0.6140227
        %v155 = vmul.f32 %v154, 1.442695
        %v156 = vpow.pop %v155
        %v157 = vsel %vm150, 1.5707964, 0.0
        %v158 = vmul.f32 %v149, %v156
        %v159 = vadd.f32 %v158, %v157
        %v160 = vand.u32 2147483647, %v159
        %vm161 = vcmp.le.f32.partialorder %v160, 0.7853982
        %vm162 = vcmp.lt.s32.totalorder %v159, 0
        %v163 = vand.u32 %v159, 2139095040
        %v164 = vshrl.u32 %v163, 23
        %v165 = vsub.s32 %v164, 127
        %v166 = vand.u32 2147483647, %v159
        %v167 = vand.u32 %v166, 8388607
        %v168 = vor.u32 %v167, 8388608
        %v169 = vsub.s32 0, %v168
        %v170 = vadd.s32 %v165, 1
        %vm171 = vcmp.gt.s32.totalorder %v170, 0
        %v172 = vsel %vm171, %v170, 0
        %v173 = vshrl.u32 %v172, 5
        %v174 = vand.u32 %v172, 31
        %v175 = vsub.s32 32, %v174
        %v176 = vshrl.u32 683565275, %v175
        %v177 = vshll.u32 683565275, %v174
        %v178 = vshrl.u32 2475754826, %v175
        %v179 = vor.u32 %v177, %v178
        %v180 = vshll.u32 2475754826, %v174
        %v181 = vshrl.u32 2131351028, %v175
        %v182 = vor.u32 %v180, %v181
        %v183 = vshll.u32 2131351028, %v174
        %v184 = vshrl.u32 2102212464, %v175
        %v185 = vor.u32 %v183, %v184
        %v186 = vshll.u32 2102212464, %v174
        %v187 = vshrl.u32 920167782, %v175
        %v188 = vor.u32 %v186, %v187
        %v189 = vshll.u32 920167782, %v174
        %v190 = vshrl.u32 1326507024, %v175
        %v191 = vor.u32 %v189, %v190
        %vm192 = vcmp.lt.s32.totalorder %v173, 1
        %vm193 = vcmp.lt.s32.totalorder %v173, 2
        %vm194 = vcmp.lt.s32.totalorder %v173, 3
        %vm195 = vcmp.lt.s32.totalorder %v173, 4
        %v196 = vsel %vm192, %v176, %v179
        %v197 = vsel %vm195, %v185, 2102212464
        %v198 = vsel %vm194, %v182, %v197
        %v199 = vsel %vm193, %v196, %v198
        %v200 = vsel %vm192, %v179, %v182
        %v201 = vsel %vm195, %v188, 920167782
        %v202 = vsel %vm194, %v185, %v201
        %v203 = vsel %vm193, %v200, %v202
        %v204 = vsel %vm192, %v182, %v185
        %v205 = vsel %vm195, %v191, 1326507024
        %v206 = vsel %vm194, %v188, %v205
        %v207 = vsel %vm193, %v204, %v206
        %v208 = vshll.u32 %v168, 8
        %v209 = vmul.u32.u64.compose %v208, %v207
        %v210 = vextract.low.u32 %v209
        %v211 = vextract.high.u32 %v209
        %v212 = vmul.u32.u64.compose %v208, %v203
        %v213 = vextract.low.u32 %v212
        %v214 = vextract.high.u32 %v212
        %v215 = vmul.u32 %v208, %v199
        %v216 = vadd.s32 %v211, %v213
        %vm217 = vc.u32 %v211, %v213
        %v218 = vadd.s32 %v214, 1
        %v219 = vsel %vm217, %v218, %v214
        %v220 = vadd.s32 %v215, %v219
        %v221 = vadd.s32 %v220, 536870912
        %v222 = vshrl.u32 %v221, 30
        %v223 = vshll.u32 %v222, 30
        %v224 = vsub.s32 %v220, %v223
        %vm225 = vcmp.lt.s32.totalorder %v224, 0
        %v226 = vsub.s32 0, %v224
        %v227 = vsel %vm225, %v226, %v224
        %v228 = vclz %v227
        %v229 = vsub.s32 %v228, 2
        %vm230 = vcmp.gt.s32.totalorder 0, %v229
        %v231 = vsel %vm230, 0, %v229
        %v232 = vsub.s32 32, %v231
        %v233 = vshll.u32 %v224, %v231
        %v234 = vshrl.u32 %v216, %v232
        %v235 = vor.u32 %v233, %v234
        %v236 = vsub.s32 4294967266, %v231
        %v237 = vadd.s32 %v236, 127
        %v238 = vshll.u32 %v237, 23
        %v239 = vor.u32 4788187, %v238
        %v240 = vand.u32 2147483647, %v239
        %v242 = vcvt.s32.f32 %v235
        %v243 = vmul.f32 %v242, %v240
        %v244 = vxor.u32 %v243, 2147483648
        %v245 = vsel %vm162, %v244, %v243
        %v246 = vsub.s32 4, %v222
        %v247 = vsel %vm162, %v246, %v222
        %v248 = vsel %vm161, %v159, %v245
        %v249 = vsel %vm161, 0, %v247
        %v250 = vcosq.f32.pop %v248
        %v251 = vsinq.f32.pop %v248
        %vm252 = vweird.f32 %v159
        %v253 = vadd.s32 %v249, 3
        %v254 = vand.u32 %v253, 3
        %vm255 = vcmp.lt.s32.totalorder %v254, 2
        %vm256 = vcmp.eq.s32.totalorder %v254, 0
        %v257 = vxor.u32 %v251, 2147483648
        %v258 = vsel %vm256, %v250, %v257
        %vm259 = vcmp.eq.s32.totalorder %v254, 2
        %v260 = vxor.u32 %v250, 2147483648
        %v261 = vsel %vm259, %v260, %v251
        %v262 = vsel %vm255, %v258, %v261
        %v263 = vsel %vm252, nan, %v262
        %264 = vst [vmem:[%s107] sm:$0xff] %v263
        %s265 = sand.u32 %s49, 1
        %s266 = scalar_lea.sflag [#allocation3], %s265
        %s267 = sand.u32 %s49, 1
        %s268 = smul.addr %s267, 8
        %s269 = scalar_lea.vmem [#allocation2], %s268
        // Predicated region
        $region25: #{tpu_custom_call.1} parent=23 // pred_check
          %p270 = pneg %p59
        $region26: #{tpu_custom_call.1} parent=23 // pred_check_branch
          %272 = sbr.rel (%p270) target = $region28
        $region27: #{tpu_custom_call.1} parent=23 // pred_region
          %s274 = ssub.s32 128, 128
          %275 = vsyncadd %s266, %s274
          %s276 = smul.addr %s15, 128
          %s277 = scalar_lea.hbm %s1, %s276
          %s279 = sshll.u32 %s269, 4
          %s280 = int_to_ptr.vmem [resolvable:$true] %s279
          %282 = dma.vmem_to_hbm [thread:$0]  %s280, 128, %s277, %s266
        $region28: #{tpu_custom_call.1} parent=23 // pred_fallthru
          _
      $region24: #{tpu_custom_call.1} parent=5 // pred_fallthru
        _
      %p283 = scmp.le.s32.totalorder 2, %s10
      // Predicated region
      $region29: #{tpu_custom_call.1} parent=5 // pred_check
        %p284 = pneg %p283
      $region30: #{tpu_custom_call.1} parent=5 // pred_check_branch
        %286 = sbr.rel (%p284) target = $region32
      $region31: #{tpu_custom_call.1} parent=5 // pred_region
        %s287 = ssub.s32 %s10, 2
        // Predicated region
        $region33: #{tpu_custom_call.1} parent=31 // pred_check
          %p288 = pneg %p65
        $region34: #{tpu_custom_call.1} parent=31 // pred_check_branch
          %290 = sbr.rel (%p288) target = $region36
        $region35: #{tpu_custom_call.1} parent=31 // pred_region
          %s291 = sand.u32 %s50, 1
          %s292 = scalar_lea.sflag [#allocation3], %s291
          %s293 = sand.u32 %s50, 1
          %s294 = smul.addr %s293, 8
          %s295 = scalar_lea.vmem [#allocation2], %s294
          %296 = dma.done %s292, 128
        $region36: #{tpu_custom_call.1} parent=31 // pred_fallthru
          _
      $region32: #{tpu_custom_call.1} parent=5 // pred_fallthru
        _
    $region6: #{tpu_custom_call.1} parent=1 // loop_footer
      %s14 = sadd.s32 1, %s10
    $region7: #{tpu_custom_call.1} parent=1 // loop_footer_branch
      %9 = sbr.rel target = $region3
    $region8: #{tpu_custom_call.1} parent=1 // loop_exit
      _
    %297 = vsyncpa [#allocation3], 1
    %s298 = scalar_lea.sflag [#allocation3], 1
    %299 = vsyncpa %s298, 1

</llo_original>
